<compile_context>
chip_gen: v7x
topology: tpu7x:2x2x1
jax: 0.10.0
libtpu: 0.0.40
codegen_flags: <defaults>
</compile_context>

<pallas_src>
import functools

import jax
import jax.numpy as jnp
from jax.experimental import pallas as pl
from jax.experimental.pallas import tpu as pltpu


def _conv1x1_pad1_clamp_kernel(x_ref, w_ref, b_ref, o_ref, *, cin, height, width):
    # x_ref: (cin,  H*W)       one image, pixels in lanes (lane-dense loads)
    # w_ref: (cout, cin)        raw conv weight
    # b_ref: (cout, 1)          raw conv bias
    # o_ref: (cout, Hp*Wp)      one padded image, pixels in lanes (lane-dense stores)
    wp = width + 2

    x = x_ref[...]                        # (cin, H*W)
    wt = w_ref[...] * 2.0                 # fold the "2 * y" into the weights (tiny vreg op)
    b = b_ref[...] * 2.0 + 3.0            # fold the "+ 3" into the bias

    # K = cin (=3) is tiny: cin broadcasted VPU multiply-adds, accumulator seeded with bias.
    #   acc[co, m] = b'[co] + sum_ci w'[co, ci] * x[ci, m]
    acc = b + wt[:, 0:1] * x[0:1, :]
    for ci in range(1, cin):
        acc = acc + wt[:, ci:ci + 1] * x[ci:ci + 1, :]
    y = jnp.clip(acc, 0.0, 6.0)           # (cout, H*W) interior results

    # Halo pixels see zero input -> per-channel constant clip(2*bias + 3, 0, 6).
    halo = jnp.clip(b, 0.0, 6.0)          # (cout, 1)
    o_ref[...] = jnp.broadcast_to(halo, o_ref.shape)

    # Scatter the interior rows into the padded output: input row r lands at padded
    # row r+1, columns 1..W.  Static, fully unrolled masked lane stores within VMEM;
    # cheap relative to the HBM traffic they save vs. padding in the wrapper.
    for r in range(height):
        dst = (r + 1) * wp + 1
        src = r * width
        o_ref[:, dst:dst + width] = y[:, src:src + width]


@jax.jit
def conv1x1_pad1_clamp(x, weight, bias):
    """x: (N, Cin, H, W) f32; weight: (Cout, Cin, 1, 1) or (Cout, Cin); bias: (Cout,).

    Returns (N, Cout, H+2, W+2) f32, matching
    Conv2d(Cin, Cout, 1, stride=1, padding=1) followed by clamp(2*y + 3, 0, 6)."""
    N, Cin, H, W = x.shape
    if weight.ndim == 4:                       # real nn.Conv2d weight is (Cout, Cin, 1, 1)
        weight = weight.reshape(weight.shape[0], weight.shape[1])
    Cout = weight.shape[0]
    Hp, Wp = H + 2, W + 2
    HW, HpWp = H * W, Hp * Wp

    x_flat = x.reshape(N, Cin, HW)             # free view: NCHW is contiguous
    b_col = bias.reshape(Cout, 1)

    kernel = functools.partial(
        _conv1x1_pad1_clamp_kernel, cin=Cin, height=H, width=W)

    out_flat = pl.pallas_call(
        kernel,
        out_shape=jax.ShapeDtypeStruct((N, Cout, HpWp), jnp.float32),
        grid_spec=pltpu.PrefetchScalarGridSpec(
            num_scalar_prefetch=0,
            grid=(N,),
            in_specs=[
                # One image per grid step; Cin/HW equal the full array dims -> legal block.
                pl.BlockSpec((None, Cin, HW), lambda n: (n, 0, 0)),
                pl.BlockSpec((Cout, Cin), lambda n: (0, 0)),
                pl.BlockSpec((Cout, 1), lambda n: (0, 0)),
            ],
            out_specs=pl.BlockSpec((None, Cout, HpWp), lambda n: (n, 0, 0)),
        ),
        compiler_params=pltpu.CompilerParams(
            dimension_semantics=("parallel",)),
    )(x_flat, weight, b_col)

    return out_flat.reshape(N, Cout, Hp, Wp)   # free view


def _reference(x, weight, bias):
    # Pure-JAX reference of the same forward pass.
    y = jnp.einsum("nchw,oc->nohw",
                   jnp.pad(x, ((0, 0), (0, 0), (1, 1), (1, 1))),
                   weight) + bias[None, :, None, None]
    return jnp.clip(2.0 * y + 3.0, 0.0, 6.0)


if __name__ == "__main__":
    key = jax.random.PRNGKey(0)
    k_x, k_w, k_b = jax.random.split(key, 3)

    # Small shapes consistent with the module: Conv2d(3, 5, 1, padding=1).
    N, Cin, H, W = 2, 3, 16, 16
    Cout = 5

    x = jax.random.normal(k_x, (N, Cin, H, W), dtype=jnp.float32)
    # Deterministic synthetic parameters, with the real nn.Conv2d weight layout.
    weight = jax.random.normal(k_w, (Cout, Cin, 1, 1), dtype=jnp.float32) * 0.5
    bias = jax.random.normal(k_b, (Cout,), dtype=jnp.float32) * 0.1

    out = jax.block_until_ready(conv1x1_pad1_clamp(x, weight, bias))

    ref = _reference(x, weight.reshape(Cout, Cin), bias)
    assert out.shape == (N, Cout, H + 2, W + 2), out.shape
    assert jnp.allclose(out, ref, atol=1e-5, rtol=1e-5), "mismatch vs reference"

    print("KERNEL_OK")
</pallas_src>

<mosaic_0001>
module attributes {stable_mosaic.version = 11 : i64} {
  func.func @_conv1x1_pad1_clamp_kernel(%arg0: i32, %arg1: memref<1x3x256xf32, #tpu.memory_space<vmem>>, %arg2: memref<5x3xf32, #tpu.memory_space<vmem>>, %arg3: memref<5x1xf32, #tpu.memory_space<vmem>>, %arg4: memref<1x5x324xf32, #tpu.memory_space<vmem>>) attributes {dimension_semantics = [#tpu.dimension_semantics<parallel>], iteration_bounds = array<i64: 2>, scalar_prefetch = 0 : i64, scratch_operands = 0 : i64, tpu.core_type = #tpu.core_type<tc>, window_params = [{transform_indices = @transform_0, window_bounds = array<i64: 1, 3, 256>}, {pipeline_mode = #tpu.pipeline_mode<synchronous>, transform_indices = @transform_1, window_bounds = array<i64: 5, 3>}, {pipeline_mode = #tpu.pipeline_mode<synchronous>, transform_indices = @transform_2, window_bounds = array<i64: 5, 1>}, {transform_indices = @transform_3, window_bounds = array<i64: 1, 5, 324>}]} {
    %c0 = arith.constant 0 : index
    %c0_0 = arith.constant 0 : index
    %c0_1 = arith.constant 0 : index
    %0 = vector.load %arg1[%c0, %c0_0, %c0_1] : memref<1x3x256xf32, #tpu.memory_space<vmem>>, vector<1x3x256xf32>
    %1 = vector.shape_cast %0 : vector<1x3x256xf32> to vector<3x256xf32>
    %c0_2 = arith.constant 0 : index
    %c0_3 = arith.constant 0 : index
    %2 = vector.load %arg2[%c0_2, %c0_3] : memref<5x3xf32, #tpu.memory_space<vmem>>, vector<5x3xf32>
    %cst = arith.constant 2.000000e+00 : f32
    %3 = vector.broadcast %cst : f32 to vector<5x3xf32>
    %4 = arith.mulf %2, %3 : vector<5x3xf32>
    %c0_4 = arith.constant 0 : index
    %c0_5 = arith.constant 0 : index
    %5 = vector.load %arg3[%c0_4, %c0_5] : memref<5x1xf32, #tpu.memory_space<vmem>>, vector<5x1xf32>
    %cst_6 = arith.constant 2.000000e+00 : f32
    %6 = vector.broadcast %cst_6 : f32 to vector<5x1xf32>
    %7 = arith.mulf %5, %6 : vector<5x1xf32>
    %cst_7 = arith.constant 3.000000e+00 : f32
    %8 = vector.broadcast %cst_7 : f32 to vector<5x1xf32>
    %9 = arith.addf %7, %8 : vector<5x1xf32>
    %10 = vector.extract_strided_slice %4 {offsets = [0, 0], sizes = [5, 1], strides = [1, 1]} : vector<5x3xf32> to vector<5x1xf32>
    %11 = vector.extract_strided_slice %1 {offsets = [0, 0], sizes = [1, 256], strides = [1, 1]} : vector<3x256xf32> to vector<1x256xf32>
    %12 = vector.broadcast %10 : vector<5x1xf32> to vector<5x256xf32>
    %13 = vector.broadcast %11 : vector<1x256xf32> to vector<5x256xf32>
    %14 = arith.mulf %12, %13 : vector<5x256xf32>
    %15 = vector.broadcast %9 : vector<5x1xf32> to vector<5x256xf32>
    %16 = arith.addf %15, %14 : vector<5x256xf32>
    %17 = vector.extract_strided_slice %4 {offsets = [0, 1], sizes = [5, 1], strides = [1, 1]} : vector<5x3xf32> to vector<5x1xf32>
    %18 = vector.extract_strided_slice %1 {offsets = [1, 0], sizes = [1, 256], strides = [1, 1]} : vector<3x256xf32> to vector<1x256xf32>
    %19 = vector.broadcast %17 : vector<5x1xf32> to vector<5x256xf32>
    %20 = vector.broadcast %18 : vector<1x256xf32> to vector<5x256xf32>
    %21 = arith.mulf %19, %20 : vector<5x256xf32>
    %22 = arith.addf %16, %21 : vector<5x256xf32>
    %23 = vector.extract_strided_slice %4 {offsets = [0, 2], sizes = [5, 1], strides = [1, 1]} : vector<5x3xf32> to vector<5x1xf32>
    %24 = vector.extract_strided_slice %1 {offsets = [2, 0], sizes = [1, 256], strides = [1, 1]} : vector<3x256xf32> to vector<1x256xf32>
    %25 = vector.broadcast %23 : vector<5x1xf32> to vector<5x256xf32>
    %26 = vector.broadcast %24 : vector<1x256xf32> to vector<5x256xf32>
    %27 = arith.mulf %25, %26 : vector<5x256xf32>
    %28 = arith.addf %22, %27 : vector<5x256xf32>
    %cst_8 = arith.constant 0.000000e+00 : f32
    %cst_9 = arith.constant 6.000000e+00 : f32
    %29 = vector.broadcast %cst_8 : f32 to vector<5x256xf32>
    %30 = arith.maximumf %29, %28 : vector<5x256xf32>
    %31 = vector.broadcast %cst_9 : f32 to vector<5x256xf32>
    %32 = arith.minimumf %31, %30 : vector<5x256xf32>
    %cst_10 = arith.constant 0.000000e+00 : f32
    %cst_11 = arith.constant 6.000000e+00 : f32
    %33 = vector.broadcast %cst_10 : f32 to vector<5x1xf32>
    %34 = arith.maximumf %33, %9 : vector<5x1xf32>
    %35 = vector.broadcast %cst_11 : f32 to vector<5x1xf32>
    %36 = arith.minimumf %35, %34 : vector<5x1xf32>
    %37 = vector.shape_cast %36 : vector<5x1xf32> to vector<5x1xf32>
    %38 = vector.broadcast %37 : vector<5x1xf32> to vector<5x324xf32>
    %c0_12 = arith.constant 0 : index
    %c0_13 = arith.constant 0 : index
    %c0_14 = arith.constant 0 : index
    %39 = vector.load %arg4[%c0_12, %c0_13, %c0_14] : memref<1x5x324xf32, #tpu.memory_space<vmem>>, vector<1x5x324xf32>
    %40 = vector.shape_cast %39 : vector<1x5x324xf32> to vector<5x324xf32>
    %41 = vector.shape_cast %38 : vector<5x324xf32> to vector<1x5x324xf32>
    tpu.vector_store %arg4[%c0_12, %c0_13, %c0_14], %41 {strides = array<i32>} : memref<1x5x324xf32, #tpu.memory_space<vmem>>, vector<1x5x324xf32>,
    %42 = vector.extract_strided_slice %32 {offsets = [0, 0], sizes = [5, 16], strides = [1, 1]} : vector<5x256xf32> to vector<5x16xf32>
    %c0_15 = arith.constant 0 : index
    %c0_16 = arith.constant 0 : index
    %c19 = arith.constant 19 : index
    %43 = vector.load %arg4[%c0_15, %c0_16, %c19] : memref<1x5x324xf32, #tpu.memory_space<vmem>>, vector<1x5x16xf32>
    %44 = vector.shape_cast %43 : vector<1x5x16xf32> to vector<5x16xf32>
    %45 = vector.shape_cast %42 : vector<5x16xf32> to vector<1x5x16xf32>
    tpu.vector_store %arg4[%c0_15, %c0_16, %c19], %45 {strides = array<i32>} : memref<1x5x324xf32, #tpu.memory_space<vmem>>, vector<1x5x16xf32>,
    %46 = vector.extract_strided_slice %32 {offsets = [0, 16], sizes = [5, 16], strides = [1, 1]} : vector<5x256xf32> to vector<5x16xf32>
    %c0_17 = arith.constant 0 : index
    %c0_18 = arith.constant 0 : index
    %c37 = arith.constant 37 : index
    %47 = vector.load %arg4[%c0_17, %c0_18, %c37] : memref<1x5x324xf32, #tpu.memory_space<vmem>>, vector<1x5x16xf32>
    %48 = vector.shape_cast %47 : vector<1x5x16xf32> to vector<5x16xf32>
    %49 = vector.shape_cast %46 : vector<5x16xf32> to vector<1x5x16xf32>
    tpu.vector_store %arg4[%c0_17, %c0_18, %c37], %49 {strides = array<i32>} : memref<1x5x324xf32, #tpu.memory_space<vmem>>, vector<1x5x16xf32>,
    %50 = vector.extract_strided_slice %32 {offsets = [0, 32], sizes = [5, 16], strides = [1, 1]} : vector<5x256xf32> to vector<5x16xf32>
    %c0_19 = arith.constant 0 : index
    %c0_20 = arith.constant 0 : index
    %c55 = arith.constant 55 : index
    %51 = vector.load %arg4[%c0_19, %c0_20, %c55] : memref<1x5x324xf32, #tpu.memory_space<vmem>>, vector<1x5x16xf32>
    %52 = vector.shape_cast %51 : vector<1x5x16xf32> to vector<5x16xf32>
    %53 = vector.shape_cast %50 : vector<5x16xf32> to vector<1x5x16xf32>
    tpu.vector_store %arg4[%c0_19, %c0_20, %c55], %53 {strides = array<i32>} : memref<1x5x324xf32, #tpu.memory_space<vmem>>, vector<1x5x16xf32>,
    %54 = vector.extract_strided_slice %32 {offsets = [0, 48], sizes = [5, 16], strides = [1, 1]} : vector<5x256xf32> to vector<5x16xf32>
    %c0_21 = arith.constant 0 : index
    %c0_22 = arith.constant 0 : index
    %c73 = arith.constant 73 : index
    %55 = vector.load %arg4[%c0_21, %c0_22, %c73] : memref<1x5x324xf32, #tpu.memory_space<vmem>>, vector<1x5x16xf32>
    %56 = vector.shape_cast %55 : vector<1x5x16xf32> to vector<5x16xf32>
    %57 = vector.shape_cast %54 : vector<5x16xf32> to vector<1x5x16xf32>
    tpu.vector_store %arg4[%c0_21, %c0_22, %c73], %57 {strides = array<i32>} : memref<1x5x324xf32, #tpu.memory_space<vmem>>, vector<1x5x16xf32>,
    %58 = vector.extract_strided_slice %32 {offsets = [0, 64], sizes = [5, 16], strides = [1, 1]} : vector<5x256xf32> to vector<5x16xf32>
    %c0_23 = arith.constant 0 : index
    %c0_24 = arith.constant 0 : index
    %c91 = arith.constant 91 : index
    %59 = vector.load %arg4[%c0_23, %c0_24, %c91] : memref<1x5x324xf32, #tpu.memory_space<vmem>>, vector<1x5x16xf32>
    %60 = vector.shape_cast %59 : vector<1x5x16xf32> to vector<5x16xf32>
    %61 = vector.shape_cast %58 : vector<5x16xf32> to vector<1x5x16xf32>
    tpu.vector_store %arg4[%c0_23, %c0_24, %c91], %61 {strides = array<i32>} : memref<1x5x324xf32, #tpu.memory_space<vmem>>, vector<1x5x16xf32>,
    %62 = vector.extract_strided_slice %32 {offsets = [0, 80], sizes = [5, 16], strides = [1, 1]} : vector<5x256xf32> to vector<5x16xf32>
    %c0_25 = arith.constant 0 : index
    %c0_26 = arith.constant 0 : index
    %c109 = arith.constant 109 : index
    %63 = vector.load %arg4[%c0_25, %c0_26, %c109] : memref<1x5x324xf32, #tpu.memory_space<vmem>>, vector<1x5x16xf32>
    %64 = vector.shape_cast %63 : vector<1x5x16xf32> to vector<5x16xf32>
    %65 = vector.shape_cast %62 : vector<5x16xf32> to vector<1x5x16xf32>
    tpu.vector_store %arg4[%c0_25, %c0_26, %c109], %65 {strides = array<i32>} : memref<1x5x324xf32, #tpu.memory_space<vmem>>, vector<1x5x16xf32>,
    %66 = vector.extract_strided_slice %32 {offsets = [0, 96], sizes = [5, 16], strides = [1, 1]} : vector<5x256xf32> to vector<5x16xf32>
    %c0_27 = arith.constant 0 : index
    %c0_28 = arith.constant 0 : index
    %c127 = arith.constant 127 : index
    %67 = vector.load %arg4[%c0_27, %c0_28, %c127] : memref<1x5x324xf32, #tpu.memory_space<vmem>>, vector<1x5x16xf32>
    %68 = vector.shape_cast %67 : vector<1x5x16xf32> to vector<5x16xf32>
    %69 = vector.shape_cast %66 : vector<5x16xf32> to vector<1x5x16xf32>
    tpu.vector_store %arg4[%c0_27, %c0_28, %c127], %69 {strides = array<i32>} : memref<1x5x324xf32, #tpu.memory_space<vmem>>, vector<1x5x16xf32>,
    %70 = vector.extract_strided_slice %32 {offsets = [0, 112], sizes = [5, 16], strides = [1, 1]} : vector<5x256xf32> to vector<5x16xf32>
    %c0_29 = arith.constant 0 : index
    %c0_30 = arith.constant 0 : index
    %c145 = arith.constant 145 : index
    %71 = vector.load %arg4[%c0_29, %c0_30, %c145] : memref<1x5x324xf32, #tpu.memory_space<vmem>>, vector<1x5x16xf32>
    %72 = vector.shape_cast %71 : vector<1x5x16xf32> to vector<5x16xf32>
    %73 = vector.shape_cast %70 : vector<5x16xf32> to vector<1x5x16xf32>
    tpu.vector_store %arg4[%c0_29, %c0_30, %c145], %73 {strides = array<i32>} : memref<1x5x324xf32, #tpu.memory_space<vmem>>, vector<1x5x16xf32>,
    %74 = vector.extract_strided_slice %32 {offsets = [0, 128], sizes = [5, 16], strides = [1, 1]} : vector<5x256xf32> to vector<5x16xf32>
    %c0_31 = arith.constant 0 : index
    %c0_32 = arith.constant 0 : index
    %c163 = arith.constant 163 : index
    %75 = vector.load %arg4[%c0_31, %c0_32, %c163] : memref<1x5x324xf32, #tpu.memory_space<vmem>>, vector<1x5x16xf32>
    %76 = vector.shape_cast %75 : vector<1x5x16xf32> to vector<5x16xf32>
    %77 = vector.shape_cast %74 : vector<5x16xf32> to vector<1x5x16xf32>
    tpu.vector_store %arg4[%c0_31, %c0_32, %c163], %77 {strides = array<i32>} : memref<1x5x324xf32, #tpu.memory_space<vmem>>, vector<1x5x16xf32>,
    %78 = vector.extract_strided_slice %32 {offsets = [0, 144], sizes = [5, 16], strides = [1, 1]} : vector<5x256xf32> to vector<5x16xf32>
    %c0_33 = arith.constant 0 : index
    %c0_34 = arith.constant 0 : index
    %c181 = arith.constant 181 : index
    %79 = vector.load %arg4[%c0_33, %c0_34, %c181] : memref<1x5x324xf32, #tpu.memory_space<vmem>>, vector<1x5x16xf32>
    %80 = vector.shape_cast %79 : vector<1x5x16xf32> to vector<5x16xf32>
    %81 = vector.shape_cast %78 : vector<5x16xf32> to vector<1x5x16xf32>
    tpu.vector_store %arg4[%c0_33, %c0_34, %c181], %81 {strides = array<i32>} : memref<1x5x324xf32, #tpu.memory_space<vmem>>, vector<1x5x16xf32>,
    %82 = vector.extract_strided_slice %32 {offsets = [0, 160], sizes = [5, 16], strides = [1, 1]} : vector<5x256xf32> to vector<5x16xf32>
    %c0_35 = arith.constant 0 : index
    %c0_36 = arith.constant 0 : index
    %c199 = arith.constant 199 : index
    %83 = vector.load %arg4[%c0_35, %c0_36, %c199] : memref<1x5x324xf32, #tpu.memory_space<vmem>>, vector<1x5x16xf32>
    %84 = vector.shape_cast %83 : vector<1x5x16xf32> to vector<5x16xf32>
    %85 = vector.shape_cast %82 : vector<5x16xf32> to vector<1x5x16xf32>
    tpu.vector_store %arg4[%c0_35, %c0_36, %c199], %85 {strides = array<i32>} : memref<1x5x324xf32, #tpu.memory_space<vmem>>, vector<1x5x16xf32>,
    %86 = vector.extract_strided_slice %32 {offsets = [0, 176], sizes = [5, 16], strides = [1, 1]} : vector<5x256xf32> to vector<5x16xf32>
    %c0_37 = arith.constant 0 : index
    %c0_38 = arith.constant 0 : index
    %c217 = arith.constant 217 : index
    %87 = vector.load %arg4[%c0_37, %c0_38, %c217] : memref<1x5x324xf32, #tpu.memory_space<vmem>>, vector<1x5x16xf32>
    %88 = vector.shape_cast %87 : vector<1x5x16xf32> to vector<5x16xf32>
    %89 = vector.shape_cast %86 : vector<5x16xf32> to vector<1x5x16xf32>
    tpu.vector_store %arg4[%c0_37, %c0_38, %c217], %89 {strides = array<i32>} : memref<1x5x324xf32, #tpu.memory_space<vmem>>, vector<1x5x16xf32>,
    %90 = vector.extract_strided_slice %32 {offsets = [0, 192], sizes = [5, 16], strides = [1, 1]} : vector<5x256xf32> to vector<5x16xf32>
    %c0_39 = arith.constant 0 : index
    %c0_40 = arith.constant 0 : index
    %c235 = arith.constant 235 : index
    %91 = vector.load %arg4[%c0_39, %c0_40, %c235] : memref<1x5x324xf32, #tpu.memory_space<vmem>>, vector<1x5x16xf32>
    %92 = vector.shape_cast %91 : vector<1x5x16xf32> to vector<5x16xf32>
    %93 = vector.shape_cast %90 : vector<5x16xf32> to vector<1x5x16xf32>
    tpu.vector_store %arg4[%c0_39, %c0_40, %c235], %93 {strides = array<i32>} : memref<1x5x324xf32, #tpu.memory_space<vmem>>, vector<1x5x16xf32>,
    %94 = vector.extract_strided_slice %32 {offsets = [0, 208], sizes = [5, 16], strides = [1, 1]} : vector<5x256xf32> to vector<5x16xf32>
    %c0_41 = arith.constant 0 : index
    %c0_42 = arith.constant 0 : index
    %c253 = arith.constant 253 : index
    %95 = vector.load %arg4[%c0_41, %c0_42, %c253] : memref<1x5x324xf32, #tpu.memory_space<vmem>>, vector<1x5x16xf32>
    %96 = vector.shape_cast %95 : vector<1x5x16xf32> to vector<5x16xf32>
    %97 = vector.shape_cast %94 : vector<5x16xf32> to vector<1x5x16xf32>
    tpu.vector_store %arg4[%c0_41, %c0_42, %c253], %97 {strides = array<i32>} : memref<1x5x324xf32, #tpu.memory_space<vmem>>, vector<1x5x16xf32>,
    %98 = vector.extract_strided_slice %32 {offsets = [0, 224], sizes = [5, 16], strides = [1, 1]} : vector<5x256xf32> to vector<5x16xf32>
    %c0_43 = arith.constant 0 : index
    %c0_44 = arith.constant 0 : index
    %c271 = arith.constant 271 : index
    %99 = vector.load %arg4[%c0_43, %c0_44, %c271] : memref<1x5x324xf32, #tpu.memory_space<vmem>>, vector<1x5x16xf32>
    %100 = vector.shape_cast %99 : vector<1x5x16xf32> to vector<5x16xf32>
    %101 = vector.shape_cast %98 : vector<5x16xf32> to vector<1x5x16xf32>
    tpu.vector_store %arg4[%c0_43, %c0_44, %c271], %101 {strides = array<i32>} : memref<1x5x324xf32, #tpu.memory_space<vmem>>, vector<1x5x16xf32>,
    %102 = vector.extract_strided_slice %32 {offsets = [0, 240], sizes = [5, 16], strides = [1, 1]} : vector<5x256xf32> to vector<5x16xf32>
    %c0_45 = arith.constant 0 : index
    %c0_46 = arith.constant 0 : index
    %c289 = arith.constant 289 : index
    %103 = vector.load %arg4[%c0_45, %c0_46, %c289] : memref<1x5x324xf32, #tpu.memory_space<vmem>>, vector<1x5x16xf32>
    %104 = vector.shape_cast %103 : vector<1x5x16xf32> to vector<5x16xf32>
    %105 = vector.shape_cast %102 : vector<5x16xf32> to vector<1x5x16xf32>
    tpu.vector_store %arg4[%c0_45, %c0_46, %c289], %105 {strides = array<i32>} : memref<1x5x324xf32, #tpu.memory_space<vmem>>, vector<1x5x16xf32>,
    return
  }
  func.func @transform_0(%arg0: i32) -> (i32, i32, i32) {
    %c0_i32 = arith.constant 0 : i32
    %c0_i32_0 = arith.constant 0 : i32
    %c0_i32_1 = arith.constant 0 : i32
    return %arg0, %c0_i32, %c0_i32_0 : i32, i32, i32
  }
  func.func @transform_1(%arg0: i32) -> (i32, i32) {
    %c0_i32 = arith.constant 0 : i32
    %c0_i32_0 = arith.constant 0 : i32
    %c0_i32_1 = arith.constant 0 : i32
    return %c0_i32, %c0_i32_0 : i32, i32
  }
  func.func @transform_2(%arg0: i32) -> (i32, i32) {
    %c0_i32 = arith.constant 0 : i32
    %c0_i32_0 = arith.constant 0 : i32
    %c0_i32_1 = arith.constant 0 : i32
    return %c0_i32, %c0_i32_0 : i32, i32
  }
  func.func @transform_3(%arg0: i32) -> (i32, i32, i32) {
    %c0_i32 = arith.constant 0 : i32
    %c0_i32_0 = arith.constant 0 : i32
    %c0_i32_1 = arith.constant 0 : i32
    return %arg0, %c0_i32, %c0_i32_0 : i32, i32, i32
  }
}

</mosaic_0001>

<llo_original>
// kernel: conv1x1_pad1_clamp.1
$region0: #{conv1x1_pad1_clamp.1}
  #allocation0 [shape = 'u32[]', space=smem, size = 0x4, offset = 0x4, fixed_abs, tag = 'smem constant byte address 0x4 - core index']
  #allocation1 [shape = 'u32[144,128]{1,0:T(1,128)}', space=vmem, size = 0x12000, scoped, tag = 'internal scratch']
  %s0 = inlined_call_operand.vmem [shape: f32[2,3,256], index: 0, kind: input, shape index: {}]
  %s1 = inlined_call_operand.vmem [shape: f32[5,3], index: 1, kind: input, shape index: {}]
  %s2 = inlined_call_operand.vmem [shape: f32[5,1], index: 2, kind: input, shape index: {}]
  %s3 = inlined_call_operand.vmem [shape: f32[2,5,324], index: 3, kind: output, shape index: {}]
  %s4 = sld [smem:[#allocation0]]
  $region45: #{conv1x1_pad1_clamp.1} parent=0
    _
  %s6 = ssub.s32 1, %s4
  %s7 = scalar_select 0, %s6, %s4
  loop: start=0, step=1, limit=4
  $region2: #{conv1x1_pad1_clamp.1} parent=0 // loop_pre_header
    _
  $region3: #{conv1x1_pad1_clamp.1} parent=0 // loop_header
    %s9 = sphi 0, %s13
    %p10 = scmp.ge.s32.totalorder %s9, 4
    %s19 = sphi 0, %s21
    %s22 = sphi 0, %s19
    %s23 = sphi 0, %s22
    %s39 = sphi 0, %s23
    %s43 = sphi 0, %s43
    %s45 = sphi 0, %s43
    %s46 = sphi 0, %s45
    %s60 = sphi 0, %s46
    %s64 = sphi 0, %s64
    %s66 = sphi 0, %s64
    %s67 = sphi 0, %s66
    %s81 = sphi 0, %s67
    %s87 = sphi 0, %s89
    %s90 = sphi 0, %s87
    %s91 = sphi 0, %s90
    %s107 = sphi 0, %s91
  $region4: #{conv1x1_pad1_clamp.1} parent=0 // loop_header_branch
    %12 = sbr.rel (%p10) target = $region8
  $region5: #{conv1x1_pad1_clamp.1} parent=0 // loop_body
    %s14 = ssub.s32 %s9, 1
    %s15 = ssub.s32 %s9, 2
    %s16 = sadd.s32 %s9, 1
    %s17 = ssub.s32 %s9, %s16
    %p18 = scmp.eq.s32.totalorder %s17, 0
    %s20 = sadd.s32 %s19, 1
    %s21 = scalar_select %p18, %s19, %s20
    %p24 = pneg %p18
    %p25 = scmp.eq.s32.totalorder %s9, 1
    %p26 = por %p24, %p25
    %p27 = scmp.ne.s32.totalorder %s19, %s22
    %p28 = scmp.eq.s32.totalorder %s9, 0
    %p29 = por %p27, %p28
    %p30 = scmp.ne.s32.totalorder %s19, %s22
    %p31 = scmp.eq.s32.totalorder %s14, 1
    %p32 = por %p30, %p31
    %p33 = scmp.ne.s32.totalorder %s22, %s23
    %p34 = scmp.eq.s32.totalorder %s14, 0
    %p35 = por %p33, %p34
    %p36 = scmp.ne.s32.totalorder %s22, %s23
    %p37 = scmp.eq.s32.totalorder %s15, 1
    %p38 = por %p36, %p37
    %p40 = scmp.ne.s32.totalorder %s23, %s39
    %p41 = scmp.eq.s32.totalorder %s15, 0
    %p42 = por %p40, %p41
    %s44 = sadd.s32 %s43, 1
    %p47 = scmp.eq.s32.totalorder %s9, 1
    %p48 = scmp.ne.s32.totalorder %s43, %s45
    %p49 = scmp.eq.s32.totalorder %s9, 0
    %p50 = por %p48, %p49
    %p51 = scmp.ne.s32.totalorder %s43, %s45
    %p52 = scmp.eq.s32.totalorder %s14, 1
    %p53 = por %p51, %p52
    %p54 = scmp.ne.s32.totalorder %s45, %s46
    %p55 = scmp.eq.s32.totalorder %s14, 0
    %p56 = por %p54, %p55
    %p57 = scmp.ne.s32.totalorder %s45, %s46
    %p58 = scmp.eq.s32.totalorder %s15, 1
    %p59 = por %p57, %p58
    %p61 = scmp.ne.s32.totalorder %s46, %s60
    %p62 = scmp.eq.s32.totalorder %s15, 0
    %p63 = por %p61, %p62
    %s65 = sadd.s32 %s64, 1
    %p68 = scmp.eq.s32.totalorder %s9, 1
    %p69 = scmp.ne.s32.totalorder %s64, %s66
    %p70 = scmp.eq.s32.totalorder %s9, 0
    %p71 = por %p69, %p70
    %p72 = scmp.ne.s32.totalorder %s64, %s66
    %p73 = scmp.eq.s32.totalorder %s14, 1
    %p74 = por %p72, %p73
    %p75 = scmp.ne.s32.totalorder %s66, %s67
    %p76 = scmp.eq.s32.totalorder %s14, 0
    %p77 = por %p75, %p76
    %p78 = scmp.ne.s32.totalorder %s66, %s67
    %p79 = scmp.eq.s32.totalorder %s15, 1
    %p80 = por %p78, %p79
    %p82 = scmp.ne.s32.totalorder %s67, %s81
    %p83 = scmp.eq.s32.totalorder %s15, 0
    %p84 = por %p82, %p83
    %s85 = ssub.s32 %s9, %s16
    %p86 = scmp.eq.s32.totalorder %s85, 0
    %s88 = sadd.s32 %s87, 1
    %s89 = scalar_select %p86, %s87, %s88
    %p92 = pneg %p86
    %p93 = scmp.eq.s32.totalorder %s9, 1
    %p94 = por %p92, %p93
    %p95 = scmp.ne.s32.totalorder %s87, %s90
    %p96 = scmp.eq.s32.totalorder %s9, 0
    %p97 = por %p95, %p96
    %p98 = scmp.ne.s32.totalorder %s87, %s90
    %p99 = scmp.eq.s32.totalorder %s14, 1
    %p100 = por %p98, %p99
    %p101 = scmp.ne.s32.totalorder %s90, %s91
    %p102 = scmp.eq.s32.totalorder %s14, 0
    %p103 = por %p101, %p102
    %p104 = scmp.ne.s32.totalorder %s90, %s91
    %p105 = scmp.eq.s32.totalorder %s15, 1
    %p106 = por %p104, %p105
    %p108 = scmp.ne.s32.totalorder %s91, %s107
    %p109 = scmp.eq.s32.totalorder %s15, 0
    %p110 = por %p108, %p109
    %p111 = scmp.le.s32.totalorder 1, %s9
    %p112 = scmp.lt.s32.totalorder %s9, 3
    %p113 = pnand %p111, %p112
    %p114 = pneg %p113
    // Predicated region
    $region9: #{conv1x1_pad1_clamp.1} parent=5 // pred_check
      _
    $region10: #{conv1x1_pad1_clamp.1} parent=5 // pred_check_branch
      %116 = sbr.rel (%p113) target = $region12
    $region11: #{conv1x1_pad1_clamp.1} parent=5 // pred_region
      %s117 = ssub.s32 %s9, 1
      // Predicated region
      $region13: #{conv1x1_pad1_clamp.1} parent=11 // pred_check
        %p118 = pneg %p56
      $region14: #{conv1x1_pad1_clamp.1} parent=11 // pred_check_branch
        %120 = sbr.rel (%p118) target = $region16
      $region15: #{conv1x1_pad1_clamp.1} parent=11 // pred_region
        _
      $region16: #{conv1x1_pad1_clamp.1} parent=11 // pred_fallthru
        _
      // Predicated region
      $region17: #{conv1x1_pad1_clamp.1} parent=11 // pred_check
        %p121 = pneg %p77
      $region18: #{conv1x1_pad1_clamp.1} parent=11 // pred_check_branch
        %123 = sbr.rel (%p121) target = $region20
      $region19: #{conv1x1_pad1_clamp.1} parent=11 // pred_region
        _
      $region20: #{conv1x1_pad1_clamp.1} parent=11 // pred_fallthru
        _
    $region12: #{conv1x1_pad1_clamp.1} parent=5 // pred_fallthru
      _
    %p124 = scmp.lt.s32.totalorder %s9, 2
    // Predicated region
    $region21: #{conv1x1_pad1_clamp.1} parent=5 // pred_check
      %p125 = pneg %p124
    $region22: #{conv1x1_pad1_clamp.1} parent=5 // pred_check_branch
      %127 = sbr.rel (%p125) target = $region24
    $region23: #{conv1x1_pad1_clamp.1} parent=5 // pred_region
      // Predicated region
      $region25: #{conv1x1_pad1_clamp.1} parent=23 // pred_check
        %p128 = pneg %p29
      $region26: #{conv1x1_pad1_clamp.1} parent=23 // pred_check_branch
        %130 = sbr.rel (%p128) target = $region28
      $region27: #{conv1x1_pad1_clamp.1} parent=23 // pred_region
        %p131 = scmp.lt.s32.totalorder %s9, 1
        %s132 = scalar_select %p131, %s9, 1
        %s133 = smul.addr %s132, 2
        %s134 = smul.addr %s133, 4
        %s135 = scalar_lea.vmem %s0, %s134
      $region28: #{conv1x1_pad1_clamp.1} parent=23 // pred_fallthru
        _
    $region24: #{conv1x1_pad1_clamp.1} parent=5 // pred_fallthru
      _
    %p136 = scmp.le.s32.totalorder 1, %s9
    %p137 = scmp.lt.s32.totalorder %s9, 3
    %p138 = pnand %p136, %p137
    %p139 = pneg %p138
    // Predicated region
    $region29: #{conv1x1_pad1_clamp.1} parent=5 // pred_check
      _
    $region30: #{conv1x1_pad1_clamp.1} parent=5 // pred_check_branch
      %141 = sbr.rel (%p138) target = $region32
    $region31: #{conv1x1_pad1_clamp.1} parent=5 // pred_region
      %s142 = ssub.s32 %s9, 1
      %p143 = scmp.lt.s32.totalorder %s14, 1
      %s144 = scalar_select %p143, %s14, 1
      %s145 = smul.addr %s144, 2
      %s146 = smul.addr %s145, 4
      %s147 = scalar_lea.vmem %s0, %s146
      %p148 = pneg %p35
      %p149 = pneg %p32
      %p150 = pneg %p56
      %p151 = pneg %p53
      %p152 = pneg %p77
      %p153 = pneg %p74
      %p154 = pneg %p103
      %p155 = pneg %p100
      %p156 = scmp.lt.s32.totalorder %s14, 1
      %s157 = scalar_select %p156, %s14, 1
      %s158 = smul.addr %s157, 3
      %s159 = smul.addr %s158, 8
      %s160 = scalar_lea.vmem %s3, %s159
      %p161 = scmp.lt.s32.totalorder %s14, 1
      %s162 = scalar_select %p161, %s14, 1
      %s163 = smul.addr %s162, 2
      %s164 = smul.addr %s163, 4
      %s165 = scalar_lea.vmem %s0, %s164
      %p166 = scmp.lt.s32.totalorder %s14, 1
      %s167 = scalar_select %p166, %s14, 1
      %s168 = smul.addr %s167, 3
      %s169 = smul.addr %s168, 8
      %s170 = scalar_lea.vmem %s3, %s169
      %v171 = vld [vmem:[%s165] sm:$0x77]
      %v172 = vld [vmem:[%s1] sm:$0x1f]
      %v173 = vmul.f32 %v172, 2.0
      %v174 = vld [vmem:[%s2] sm:$0x1f]
      %v175 = vmul.f32 %v174, 2.0
      %v176 = vadd.f32 %v175, 3.0
      %178 = vset.pattern.permute.xlu0 0
      %179 = vperm.xlu0 %178, %v173
      %v180 = vpop.permute.xlu0 %179
      %v183 = vlaneseq
      %v184 = vshrl.u32 %v183, 7
      %v185 = vsub.s32 0, %v184
      %v186 = vrot.slane %v171, %v185
      %v187 = vlaneseq
      %v188 = vshrl.u32 %v187, 7
      %v189 = vsub.s32 4, %v188
      %v190 = vrot.slane %v171, %v189
      %v193 = vlaneseq
      %v194 = vshrl.u32 %v193, 7
      %v195 = vsub.s32 0, %v194
      %v196 = vrot.slane %v186, %v195
      %v197 = vlaneseq
      %v198 = vshrl.u32 %v197, 7
      %v199 = vsub.s32 0, %v198
      %v200 = vrot.slane %v190, %v199
      %v201 = vmul.f32 %v180, %v196
      %v202 = vmul.f32 %v180, %v200
      %204 = vset.pattern.permute.xlu0 0
      %205 = vperm.xlu0 %204, %v176
      %v206 = vpop.permute.xlu0 %205
      %v208 = vadd.f32 %v206, %v201
      %v209 = vadd.f32 %v206, %v202
      %210 = vset.pattern.permute.xlu0 1
      %211 = vperm.xlu0 %210, %v173
      %v212 = vpop.permute.xlu0 %211
      %v214 = vlaneseq
      %v215 = vshrl.u32 %v214, 7
      %v216 = vsub.s32 1, %v215
      %v217 = vrot.slane %v171, %v216
      %v218 = vlaneseq
      %v219 = vshrl.u32 %v218, 7
      %v220 = vsub.s32 5, %v219
      %v221 = vrot.slane %v171, %v220
      %v224 = vlaneseq
      %v225 = vshrl.u32 %v224, 7
      %v226 = vsub.s32 1, %v225
      %v227 = vrot.slane %v217, %v226
      %v228 = vlaneseq
      %v229 = vshrl.u32 %v228, 7
      %v230 = vsub.s32 1, %v229
      %v231 = vrot.slane %v221, %v230
      %v232 = vmul.f32 %v212, %v227
      %v233 = vmul.f32 %v212, %v231
      %v234 = vadd.f32 %v208, %v232
      %v235 = vadd.f32 %v209, %v233
      %236 = vset.pattern.permute.xlu0 2
      %237 = vperm.xlu0 %236, %v173
      %v238 = vpop.permute.xlu0 %237
      %v240 = vlaneseq
      %v241 = vshrl.u32 %v240, 7
      %v242 = vsub.s32 2, %v241
      %v243 = vrot.slane %v171, %v242
      %v244 = vlaneseq
      %v245 = vshrl.u32 %v244, 7
      %v246 = vsub.s32 6, %v245
      %v247 = vrot.slane %v171, %v246
      %v250 = vlaneseq
      %v251 = vshrl.u32 %v250, 7
      %v252 = vsub.s32 2, %v251
      %v253 = vrot.slane %v243, %v252
      %v254 = vlaneseq
      %v255 = vshrl.u32 %v254, 7
      %v256 = vsub.s32 2, %v255
      %v257 = vrot.slane %v247, %v256
      %v258 = vmul.f32 %v238, %v253
      %v259 = vmul.f32 %v238, %v257
      %v260 = vadd.f32 %v234, %v258
      %v261 = vadd.f32 %v235, %v259
      %v262 = vmax.f32 %v260, 0.0
      %v263 = vmax.f32 %v261, 0.0
      %v264 = vmin.f32 %v262, 6.0
      %v265 = vmin.f32 %v263, 6.0
      %v266 = vmax.f32 %v176, 0.0
      %v267 = vmin.f32 %v266, 6.0
      %269 = vset.pattern.permute.xlu0 0
      %270 = vperm.xlu0 %269, %v267
      %v271 = vpop.permute.xlu0 %270
      %273 = vst [vmem:[%s170] sm:$0x1f] %v271
      %274 = vst [vmem:[%s170 + $0x8] sm:$0x1f] %v271
      %vm275 = vcmask 552960
      %276 = vst.msk [vmem:[%s170 + $0x10] sm:$0x1f] %vm275, %v271
      %278 = vrot.lane.b32.xlu0 %v264, 19
      %v279 = vpop.permute.xlu0 %278
      %vm281 = vcmask 282776
      %282 = vst.msk [vmem:[%s170] sm:$0x1f] %vm281, %v279
      %283 = vrot.lane.b32.xlu0 %v264, 21
      %v284 = vpop.permute.xlu0 %283
      %vm286 = vcmask 430376
      %287 = vst.msk [vmem:[%s170] sm:$0x1f] %vm286, %v284
      %288 = vrot.lane.b32.xlu0 %v264, 23
      %v289 = vpop.permute.xlu0 %288
      %vm291 = vcmask 577976
      %292 = vst.msk [vmem:[%s170] sm:$0x1f] %vm291, %v289
      %293 = vrot.lane.b32.xlu0 %v264, 25
      %v294 = vpop.permute.xlu0 %293
      %vm296 = vcmask 725576
      %297 = vst.msk [vmem:[%s170] sm:$0x1f] %vm296, %v294
      %298 = vrot.lane.b32.xlu0 %v264, 27
      %v299 = vpop.permute.xlu0 %298
      %vm301 = vcmask 873176
      %302 = vst.msk [vmem:[%s170] sm:$0x1f] %vm301, %v299
      %303 = vrot.lane.b32.xlu0 %v264, 29
      %v304 = vpop.permute.xlu0 %303
      %vm306 = vcmask 1020776
      %307 = vst.msk [vmem:[%s170] sm:$0x1f] %vm306, %v304
      %308 = vrot.lane.b32.xlu0 %v264, 31
      %v309 = vpop.permute.xlu0 %308
      %vm311 = vcmask 1045496
      %312 = vst.msk [vmem:[%s170] sm:$0x1f] %vm311, %v309
      %vm313 = vcmask 118784
      %314 = vst.msk [vmem:[%s170 + $0x8] sm:$0x1f] %vm313, %v309
      %315 = vrot.lane.b32.xlu0 %v264, 33
      %v316 = vpop.permute.xlu0 %315
      %vm318 = vcmask 266376
      %319 = vst.msk [vmem:[%s170 + $0x8] sm:$0x1f] %vm318, %v316
      %321 = vrot.lane.b32.xlu0 %v265, 35
      %v322 = vpop.permute.xlu0 %321
      %vm324 = vcmask 413976
      %325 = vst.msk [vmem:[%s170 + $0x8] sm:$0x1f] %vm324, %v322
      %326 = vrot.lane.b32.xlu0 %v265, 37
      %v327 = vpop.permute.xlu0 %326
      %vm329 = vcmask 561576
      %330 = vst.msk [vmem:[%s170 + $0x8] sm:$0x1f] %vm329, %v327
      %331 = vrot.lane.b32.xlu0 %v265, 39
      %v332 = vpop.permute.xlu0 %331
      %vm334 = vcmask 709176
      %335 = vst.msk [vmem:[%s170 + $0x8] sm:$0x1f] %vm334, %v332
      %336 = vrot.lane.b32.xlu0 %v265, 41
      %v337 = vpop.permute.xlu0 %336
      %vm339 = vcmask 856776
      %340 = vst.msk [vmem:[%s170 + $0x8] sm:$0x1f] %vm339, %v337
      %341 = vrot.lane.b32.xlu0 %v265, 43
      %v342 = vpop.permute.xlu0 %341
      %vm344 = vcmask 1004376
      %345 = vst.msk [vmem:[%s170 + $0x8] sm:$0x1f] %vm344, %v342
      %346 = vrot.lane.b32.xlu0 %v265, 45
      %v347 = vpop.permute.xlu0 %346
      %vm349 = vcmask 1045480
      %350 = vst.msk [vmem:[%s170 + $0x8] sm:$0x1f] %vm349, %v347
      %vm351 = vcmask 102400
      %352 = vst.msk [vmem:[%s170 + $0x10] sm:$0x1f] %vm351, %v347
      %353 = vrot.lane.b32.xlu0 %v265, 47
      %v354 = vpop.permute.xlu0 %353
      %vm356 = vcmask 249976
      %357 = vst.msk [vmem:[%s170 + $0x10] sm:$0x1f] %vm356, %v354
      %358 = vrot.lane.b32.xlu0 %v265, 49
      %v359 = vpop.permute.xlu0 %358
      %vm361 = vcmask 397576
      %362 = vst.msk [vmem:[%s170 + $0x10] sm:$0x1f] %vm361, %v359
      %p363 = scmp.lt.s32.totalorder %s14, 1
      %s364 = scalar_select %p363, %s14, 1
      %s365 = smul.addr %s364, 3
      %s366 = smul.addr %s365, 8
      %s367 = scalar_lea.vmem %s3, %s366
      // Predicated region
      $region33: #{conv1x1_pad1_clamp.1} parent=31 // pred_check
        %p368 = pneg %p100
      $region34: #{conv1x1_pad1_clamp.1} parent=31 // pred_check_branch
        %370 = sbr.rel (%p368) target = $region36
      $region35: #{conv1x1_pad1_clamp.1} parent=31 // pred_region
        _
      $region36: #{conv1x1_pad1_clamp.1} parent=31 // pred_fallthru
        _
    $region32: #{conv1x1_pad1_clamp.1} parent=5 // pred_fallthru
      _
    %p371 = scmp.le.s32.totalorder 2, %s9
    // Predicated region
    $region37: #{conv1x1_pad1_clamp.1} parent=5 // pred_check
      %p372 = pneg %p371
    $region38: #{conv1x1_pad1_clamp.1} parent=5 // pred_check_branch
      %374 = sbr.rel (%p372) target = $region40
    $region39: #{conv1x1_pad1_clamp.1} parent=5 // pred_region
      %s375 = ssub.s32 %s9, 2
      // Predicated region
      $region41: #{conv1x1_pad1_clamp.1} parent=39 // pred_check
        %p376 = pneg %p106
      $region42: #{conv1x1_pad1_clamp.1} parent=39 // pred_check_branch
        %378 = sbr.rel (%p376) target = $region44
      $region43: #{conv1x1_pad1_clamp.1} parent=39 // pred_region
        %p379 = scmp.lt.s32.totalorder %s15, 1
        %s380 = scalar_select %p379, %s15, 1
        %s381 = smul.addr %s380, 3
        %s382 = smul.addr %s381, 8
        %s383 = scalar_lea.vmem %s3, %s382
      $region44: #{conv1x1_pad1_clamp.1} parent=39 // pred_fallthru
        _
    $region40: #{conv1x1_pad1_clamp.1} parent=5 // pred_fallthru
      _
  $region6: #{conv1x1_pad1_clamp.1} parent=0 // loop_footer
    %s13 = sadd.s32 1, %s9
  $region7: #{conv1x1_pad1_clamp.1} parent=0 // loop_footer_branch
    %8 = sbr.rel target = $region3
  $region8: #{conv1x1_pad1_clamp.1} parent=0 // loop_exit
    _

</llo_original>
